<compile_context>
chip_gen: v7x
topology: tpu7x:2x2x1
jax: 0.10.0
libtpu: 0.0.40
codegen_flags: <defaults>
</compile_context>

<pallas_src>
import functools

import jax
import jax.numpy as jnp
from jax import lax
from jax.experimental import pallas as pl
from jax.experimental.pallas import tpu as pltpu
import numpy as np


# ---------------------------------------------------------------------------
# Pallas kernel: binary 3x3 conv (single K=T*Cin matmul) + folded BN (+ residual) + Hardtanh
# ---------------------------------------------------------------------------
def _fused_conv_kernel(*refs, KH, KW, has_residual, in_kernel_taps):
    # Per-grid-step blocks (grid is over the batch dimension):
    #   refs[0] : if in_kernel_taps: (1, H+2, W+2, Cin) binarized padded input, bf16
    #             else             : (1, HWout, T*Cin)  pre-built strided im2col, bf16
    #   refs[1] : (T*Cin, Cout_pad)  binarized weights, bf16 (zero-padded channels)
    #   refs[2] : (1, Cout_pad)      folded BN scale = gamma / sqrt(var + eps)
    #   refs[3] : (1, Cout_pad)      folded BN shift = beta - mean * scale
    #   refs[4] : (1, HWout, Cout_pad) residual (only if has_residual)
    #   last    : (1, HWout, Cout_pad) output, f32
    x_ref, w_ref, scale_ref, shift_ref = refs[0], refs[1], refs[2], refs[3]
    if has_residual:
        res_ref, o_ref = refs[4], refs[5]
    else:
        res_ref, o_ref = None, refs[4]

    if in_kernel_taps:
        Hp, Wp, Cin = x_ref.shape[1], x_ref.shape[2], x_ref.shape[3]
        H, W = Hp - (KH - 1), Wp - (KW - 1)
        # Full-tile load, then build the 9 shifted taps with static slices (no HBM im2col).
        # Slicing/concat/reshape is done in f32 (best-supported relayout path), matmul in bf16.
        x = x_ref[0].astype(jnp.float32)                       # (Hp, Wp, Cin)
        pieces = [x[kh:kh + H, kw:kw + W, :]
                  for kh in range(KH) for kw in range(KW)]     # 9 x (H, W, Cin)
        col = jnp.concatenate(pieces, axis=-1)                 # (H, W, T*Cin)
        col = col.reshape(H * W, KH * KW * Cin).astype(jnp.bfloat16)
    else:
        col = x_ref[0]                                         # (HWout, T*Cin) bf16

    # Single well-shaped MXU matmul: K = T*Cin, f32 accumulation (exact for +-1/0 operands).
    acc = jnp.dot(col, w_ref[...], preferred_element_type=jnp.float32)  # (HWout, Cout_pad)

    out = acc * scale_ref[...] + shift_ref[...]                # folded BatchNorm (inference)
    if has_residual:
        out = out + res_ref[0]                                 # shortcut add
    o_ref[0] = jnp.clip(out, -1.0, 1.0)                        # Hardtanh


def binary_conv3x3_bn_act(x_nhwc, w_hwio, bn_scale, bn_shift, *, stride=1, residual_nhwc=None):
    """sign-binary 3x3 conv (pad=1, given stride) + folded BN (+ residual) + Hardtanh."""
    x_nhwc = x_nhwc.astype(jnp.float32)
    N, H, W, Cin = x_nhwc.shape
    KH, KW, _, Cout = w_hwio.shape
    T = KH * KW
    Hout = (H + 2 - KH) // stride + 1
    Wout = (W + 2 - KW) // stride + 1
    HWout = Hout * Wout
    Cout_pad = max(128, -(-Cout // 128) * 128)                 # lane-dense output stores

    # Pre-binarize + downcast once in the wrapper (sign values are exact in bf16);
    # pad AFTER the sign so the zero padding is preserved (sign(0) = 0 in the reference too).
    xb = jnp.sign(x_nhwc).astype(jnp.bfloat16)
    xpad = jnp.pad(xb, ((0, 0), (1, 1), (1, 1), (0, 0)))       # (N, H+2, W+2, Cin)

    wb = jnp.sign(w_hwio.astype(jnp.float32)).astype(jnp.bfloat16).reshape(T * Cin, Cout)
    wb = jnp.pad(wb, ((0, 0), (0, Cout_pad - Cout)))
    scale = jnp.pad(bn_scale.astype(jnp.float32), (0, Cout_pad - Cout)).reshape(1, Cout_pad)
    shift = jnp.pad(bn_shift.astype(jnp.float32), (0, Cout_pad - Cout)).reshape(1, Cout_pad)

    has_res = residual_nhwc is not None

    if stride == 1:
        # Taps are built in-kernel from the padded bf16 input (read once; no 9x HBM blowup).
        x_arg = xpad
        x_spec = pl.BlockSpec((1, H + 2, W + 2, Cin), lambda n: (n, 0, 0, 0))
        in_kernel_taps = True
    else:
        # Strided conv: build an im2col that only contains the needed output positions
        # (bf16, ~T/stride^2 of the input size), so the kernel does no wasted MXU work
        # and writes no output that would later be discarded.
        taps = [xpad[:, kh:kh + stride * (Hout - 1) + 1:stride,
                     kw:kw + stride * (Wout - 1) + 1:stride, :].reshape(N, HWout, Cin)
                for kh in range(KH) for kw in range(KW)]
        x_arg = jnp.concatenate(taps, axis=-1)                 # (N, HWout, T*Cin) bf16
        x_spec = pl.BlockSpec((1, HWout, T * Cin), lambda n: (n, 0, 0))
        in_kernel_taps = False

    in_specs = [
        x_spec,
        pl.BlockSpec((T * Cin, Cout_pad), lambda n: (0, 0)),
        pl.BlockSpec((1, Cout_pad), lambda n: (0, 0)),
        pl.BlockSpec((1, Cout_pad), lambda n: (0, 0)),
    ]
    args = [x_arg, wb, scale, shift]
    if has_res:
        res = residual_nhwc.astype(jnp.float32).reshape(N, HWout, Cout)
        res = jnp.pad(res, ((0, 0), (0, 0), (0, Cout_pad - Cout)))
        in_specs.append(pl.BlockSpec((1, HWout, Cout_pad), lambda n: (n, 0, 0)))
        args.append(res)

    kernel = functools.partial(_fused_conv_kernel, KH=KH, KW=KW,
                               has_residual=has_res, in_kernel_taps=in_kernel_taps)

    out = pl.pallas_call(
        kernel,
        grid=(N,),
        in_specs=in_specs,
        out_specs=pl.BlockSpec((1, HWout, Cout_pad), lambda n: (n, 0, 0)),
        out_shape=jax.ShapeDtypeStruct((N, HWout, Cout_pad), jnp.float32),
        compiler_params=pltpu.CompilerParams(dimension_semantics=("parallel",)),
    )(*args)

    return out[:, :, :Cout].reshape(N, Hout, Wout, Cout)


# ---------------------------------------------------------------------------
# Parameter construction / BatchNorm folding (plain-JAX glue)
# ---------------------------------------------------------------------------
def _bn_params(key, c):
    kg, kb, km, kv = jax.random.split(key, 4)
    return dict(
        gamma=jax.random.uniform(kg, (c,), jnp.float32, 0.5, 1.5),
        beta=jax.random.normal(kb, (c,), jnp.float32) * 0.1,
        mean=jax.random.normal(km, (c,), jnp.float32) * 0.1,
        var=jax.random.uniform(kv, (c,), jnp.float32, 0.5, 1.5),
    )


def _fold_bn(p, eps=1e-5):
    scale = p["gamma"] / jnp.sqrt(p["var"] + eps)
    shift = p["beta"] - p["mean"] * scale
    return scale, shift


class BasicBlock1w1aPallas:
    """JAX/Pallas port of BasicBlock_1w1a (forward pass only)."""
    expansion = 1

    def __init__(self, in_planes, planes, stride=1, key=None):
        if key is None:
            key = jax.random.PRNGKey(0)
        k1, k2, k3, k4 = jax.random.split(key, 4)
        self.in_planes = in_planes
        self.planes = planes
        self.stride = stride
        # Conv weights stored in HWIO layout (KH, KW, Cin, Cout); bias=False as in PyTorch.
        self.w1 = jax.random.normal(k1, (3, 3, in_planes, planes), jnp.float32) * 0.1
        self.w2 = jax.random.normal(k2, (3, 3, planes, planes), jnp.float32) * 0.1
        self.bn1 = _bn_params(k3, planes)
        self.bn2 = _bn_params(k4, planes)

    def _shortcut(self, x_nhwc):
        # Mirrors the PyTorch module: AvgPool2d((2,2)) then zero-pad channels by planes//4
        # on both sides. TODO(synk): as in the PyTorch spec, this is only shape-consistent
        # for stride==2 with planes == 2*in_planes (or the identity case).
        if self.stride != 1 or self.in_planes != self.expansion * self.planes:
            N, H, W, C = x_nhwc.shape
            pooled = x_nhwc.reshape(N, H // 2, 2, W // 2, 2, C).mean(axis=(2, 4))
            pad = 0 if self.planes == self.expansion * self.in_planes else self.planes // 4
            return jnp.pad(pooled, ((0, 0), (0, 0), (0, 0), (pad, pad)))
        return x_nhwc

    def __call__(self, x_nchw, num_bits=1, num_grad_bits=1):
        # num_bits / num_grad_bits accepted for interface parity; unused (1w1a = sign binarization).
        x = jnp.transpose(x_nchw, (0, 2, 3, 1)).astype(jnp.float32)   # NCHW -> NHWC

        # out = act1(bn1(conv1(x)))           -- no residual, stride possibly > 1
        s1, b1 = _fold_bn(self.bn1)
        out = binary_conv3x3_bn_act(x, self.w1, s1, b1, stride=self.stride, residual_nhwc=None)

        # out = act2(bn2(conv2(out)) + shortcut(x))
        s2, b2 = _fold_bn(self.bn2)
        out = binary_conv3x3_bn_act(out, self.w2, s2, b2, stride=1,
                                    residual_nhwc=self._shortcut(x))

        return jnp.transpose(out, (0, 3, 1, 2))   # NHWC -> NCHW


# ---------------------------------------------------------------------------
# Pure-JAX reference (for correctness checking)
# ---------------------------------------------------------------------------
def reference_forward(x_nchw, block):
    x = jnp.transpose(x_nchw, (0, 2, 3, 1)).astype(jnp.float32)

    def bconv(inp, w, stride):
        return lax.conv_general_dilated(
            jnp.sign(inp), jnp.sign(w), (stride, stride), [(1, 1), (1, 1)],
            dimension_numbers=("NHWC", "HWIO", "NHWC"),
            precision=lax.Precision.HIGHEST)

    s1, b1 = _fold_bn(block.bn1)
    out = jnp.clip(bconv(x, block.w1, block.stride) * s1 + b1, -1.0, 1.0)
    s2, b2 = _fold_bn(block.bn2)
    out = jnp.clip(bconv(out, block.w2, 1) * s2 + b2 + block._shortcut(x), -1.0, 1.0)
    return jnp.transpose(out, (0, 3, 1, 2))


if __name__ == "__main__":
    key = jax.random.PRNGKey(0)
    kx, kb1, kb2 = jax.random.split(key, 3)

    x = jax.random.normal(kx, (2, 4, 16, 16), jnp.float32)   # NCHW, like PyTorch

    # Strided block with channel expansion: exercises the strided-im2col conv1 path,
    # the in-kernel-tap conv2 path with residual, and the avg-pool/channel-pad shortcut.
    blk_a = BasicBlock1w1aPallas(4, 8, stride=2, key=kb1)
    out_a = jax.block_until_ready(blk_a(x, num_bits=1, num_grad_bits=1))
    assert out_a.shape == (2, 8, 8, 8), out_a.shape
    ref_a = jax.block_until_ready(reference_forward(x, blk_a))
    np.testing.assert_allclose(np.asarray(out_a), np.asarray(ref_a), atol=1e-4, rtol=1e-4)

    # Identity-shortcut block: exercises the stride-1, no-residual in-kernel-tap path.
    blk_b = BasicBlock1w1aPallas(4, 4, stride=1, key=kb2)
    out_b = jax.block_until_ready(blk_b(x, num_bits=1, num_grad_bits=1))
    assert out_b.shape == (2, 4, 16, 16), out_b.shape
    ref_b = jax.block_until_ready(reference_forward(x, blk_b))
    np.testing.assert_allclose(np.asarray(out_b), np.asarray(ref_b), atol=1e-4, rtol=1e-4)

    print("KERNEL_OK")
</pallas_src>

<mosaic_0001>
module attributes {stable_mosaic.version = 11 : i64} {
  func.func @_fused_conv_kernel(%arg0: i32, %arg1: memref<1x64x36xbf16, #tpu.memory_space<vmem>>, %arg2: memref<36x128xbf16, #tpu.memory_space<vmem>>, %arg3: memref<1x128xf32, #tpu.memory_space<vmem>>, %arg4: memref<1x128xf32, #tpu.memory_space<vmem>>, %arg5: memref<1x64x128xf32, #tpu.memory_space<vmem>>) attributes {dimension_semantics = [#tpu.dimension_semantics<parallel>], iteration_bounds = array<i64: 2>, scalar_prefetch = 0 : i64, scratch_operands = 0 : i64, tpu.core_type = #tpu.core_type<tc>, window_params = [{transform_indices = @transform_0, window_bounds = array<i64: 1, 64, 36>}, {pipeline_mode = #tpu.pipeline_mode<synchronous>, transform_indices = @transform_1, window_bounds = array<i64: 36, 128>}, {pipeline_mode = #tpu.pipeline_mode<synchronous>, transform_indices = @transform_2, window_bounds = array<i64: 1, 128>}, {pipeline_mode = #tpu.pipeline_mode<synchronous>, transform_indices = @transform_3, window_bounds = array<i64: 1, 128>}, {transform_indices = @transform_4, window_bounds = array<i64: 1, 64, 128>}]} {
    %c0 = arith.constant 0 : index
    %c0_0 = arith.constant 0 : index
    %c0_1 = arith.constant 0 : index
    %0 = vector.load %arg1[%c0, %c0_0, %c0_1] : memref<1x64x36xbf16, #tpu.memory_space<vmem>>, vector<1x64x36xbf16>
    %1 = vector.shape_cast %0 : vector<1x64x36xbf16> to vector<64x36xbf16>
    %c0_2 = arith.constant 0 : index
    %c0_3 = arith.constant 0 : index
    %2 = vector.load %arg2[%c0_2, %c0_3] : memref<36x128xbf16, #tpu.memory_space<vmem>>, vector<36x128xbf16>
    %cst = arith.constant dense<0.000000e+00> : vector<64x128xf32>
    %3 = tpu.matmul %1, %2, %cst {dimension_numbers = #tpu.dot_dimension_numbers<[1], [0], [0], [1], [0, 0, 1, 1], [], []>} : vector<64x36xbf16>, vector<36x128xbf16>, vector<64x128xf32> -> vector<64x128xf32>
    %c0_4 = arith.constant 0 : index
    %c0_5 = arith.constant 0 : index
    %4 = vector.load %arg3[%c0_4, %c0_5] : memref<1x128xf32, #tpu.memory_space<vmem>>, vector<1x128xf32>
    %5 = vector.broadcast %4 : vector<1x128xf32> to vector<64x128xf32>
    %6 = arith.mulf %3, %5 : vector<64x128xf32>
    %c0_6 = arith.constant 0 : index
    %c0_7 = arith.constant 0 : index
    %7 = vector.load %arg4[%c0_6, %c0_7] : memref<1x128xf32, #tpu.memory_space<vmem>>, vector<1x128xf32>
    %8 = vector.broadcast %7 : vector<1x128xf32> to vector<64x128xf32>
    %9 = arith.addf %6, %8 : vector<64x128xf32>
    %cst_8 = arith.constant -1.000000e+00 : f32
    %cst_9 = arith.constant 1.000000e+00 : f32
    %10 = vector.broadcast %cst_8 : f32 to vector<64x128xf32>
    %11 = arith.maximumf %10, %9 : vector<64x128xf32>
    %12 = vector.broadcast %cst_9 : f32 to vector<64x128xf32>
    %13 = arith.minimumf %12, %11 : vector<64x128xf32>
    %c0_10 = arith.constant 0 : index
    %c0_11 = arith.constant 0 : index
    %c0_12 = arith.constant 0 : index
    %14 = vector.load %arg5[%c0_10, %c0_11, %c0_12] : memref<1x64x128xf32, #tpu.memory_space<vmem>>, vector<1x64x128xf32>
    %15 = vector.shape_cast %14 : vector<1x64x128xf32> to vector<64x128xf32>
    %16 = vector.shape_cast %13 : vector<64x128xf32> to vector<1x64x128xf32>
    tpu.vector_store %arg5[%c0_10, %c0_11, %c0_12], %16 {strides = array<i32>} : memref<1x64x128xf32, #tpu.memory_space<vmem>>, vector<1x64x128xf32>,
    return
  }
  func.func @transform_0(%arg0: i32) -> (i32, i32, i32) {
    %c0_i32 = arith.constant 0 : i32
    %c0_i32_0 = arith.constant 0 : i32
    %c0_i32_1 = arith.constant 0 : i32
    return %arg0, %c0_i32, %c0_i32_0 : i32, i32, i32
  }
  func.func @transform_1(%arg0: i32) -> (i32, i32) {
    %c0_i32 = arith.constant 0 : i32
    %c0_i32_0 = arith.constant 0 : i32
    %c0_i32_1 = arith.constant 0 : i32
    return %c0_i32, %c0_i32_0 : i32, i32
  }
  func.func @transform_2(%arg0: i32) -> (i32, i32) {
    %c0_i32 = arith.constant 0 : i32
    %c0_i32_0 = arith.constant 0 : i32
    %c0_i32_1 = arith.constant 0 : i32
    return %c0_i32, %c0_i32_0 : i32, i32
  }
  func.func @transform_3(%arg0: i32) -> (i32, i32) {
    %c0_i32 = arith.constant 0 : i32
    %c0_i32_0 = arith.constant 0 : i32
    %c0_i32_1 = arith.constant 0 : i32
    return %c0_i32, %c0_i32_0 : i32, i32
  }
  func.func @transform_4(%arg0: i32) -> (i32, i32, i32) {
    %c0_i32 = arith.constant 0 : i32
    %c0_i32_0 = arith.constant 0 : i32
    %c0_i32_1 = arith.constant 0 : i32
    return %arg0, %c0_i32, %c0_i32_0 : i32, i32, i32
  }
}

</mosaic_0001>

<llo_original>
// kernel: tpu_custom_call.1
$region0: #{tpu_custom_call.1}
  #allocation0 [shape = 'u32[]', space=smem, size = 0x4, offset = 0x4, fixed_abs, tag = 'smem constant byte address 0x4 - core index']
  #allocation1 [shape = 'u32[144,128]{1,0:T(1,128)}', space=vmem, size = 0x12000, scoped, tag = 'internal scratch']
  %s0 = inlined_call_operand.vmem [shape: bf16[2,64,36], index: 0, kind: input, shape index: {}]
  %s1 = inlined_call_operand.vmem [shape: bf16[36,128], index: 1, kind: input, shape index: {}]
  %s2 = inlined_call_operand.vmem [shape: f32[1,128], index: 2, kind: input, shape index: {}]
  %s3 = inlined_call_operand.vmem [shape: f32[1,128], index: 3, kind: input, shape index: {}]
  %s4 = inlined_call_operand.hbm [shape: f32[2,64,128], index: 4, kind: output, shape index: {}]
  %s5 = sld [smem:[#allocation0]]
  $region49: #{tpu_custom_call.1} parent=0
    _
  %s7 = ssub.s32 1, %s5
  %s8 = scalar_select 0, %s7, %s5
  $region1: #{tpu_custom_call.1} parent=0
    #allocation2 [shape = 'u8[65536]{0}', space=vmem, size = 0x10000, scoped, tag = 'output window, operand 0']
    #allocation3 [shape = 's32[2]{0}', space=sflag, size = 0x8, scoped, tag = 'scoped memory for tpu_custom_call.1']
    %9 = vsyncpa [#allocation3], 0
    %s10 = scalar_lea.sflag [#allocation3], 1
    %11 = vsyncpa %s10, 0
    loop: start=0, step=1, limit=4
    $region2: #{tpu_custom_call.1} parent=1 // loop_pre_header
      _
    $region3: #{tpu_custom_call.1} parent=1 // loop_header
      %s13 = sphi 0, %s17
      %p14 = scmp.ge.s32.totalorder %s13, 4
      %s23 = sphi 0, %s25
      %s26 = sphi 0, %s23
      %s27 = sphi 0, %s26
      %s43 = sphi 0, %s27
      %s47 = sphi 0, %s47
      %s49 = sphi 0, %s47
      %s50 = sphi 0, %s49
      %s64 = sphi 0, %s50
      %s68 = sphi 0, %s68
      %s70 = sphi 0, %s68
      %s71 = sphi 0, %s70
      %s85 = sphi 0, %s71
      %s89 = sphi 0, %s89
      %s91 = sphi 0, %s89
      %s92 = sphi 0, %s91
      %s106 = sphi 0, %s92
      %s112 = sphi 0, %s114
      %s115 = sphi 0, %s112
      %s116 = sphi 0, %s115
      %s132 = sphi 0, %s116
    $region4: #{tpu_custom_call.1} parent=1 // loop_header_branch
      %16 = sbr.rel (%p14) target = $region8
    $region5: #{tpu_custom_call.1} parent=1 // loop_body
      %s18 = ssub.s32 %s13, 1
      %s19 = ssub.s32 %s13, 2
      %s20 = sadd.s32 %s13, 1
      %s21 = ssub.s32 %s13, %s20
      %p22 = scmp.eq.s32.totalorder %s21, 0
      %s24 = sadd.s32 %s23, 1
      %s25 = scalar_select %p22, %s23, %s24
      %p28 = pneg %p22
      %p29 = scmp.eq.s32.totalorder %s13, 1
      %p30 = por %p28, %p29
      %p31 = scmp.ne.s32.totalorder %s23, %s26
      %p32 = scmp.eq.s32.totalorder %s13, 0
      %p33 = por %p31, %p32
      %p34 = scmp.ne.s32.totalorder %s23, %s26
      %p35 = scmp.eq.s32.totalorder %s18, 1
      %p36 = por %p34, %p35
      %p37 = scmp.ne.s32.totalorder %s26, %s27
      %p38 = scmp.eq.s32.totalorder %s18, 0
      %p39 = por %p37, %p38
      %p40 = scmp.ne.s32.totalorder %s26, %s27
      %p41 = scmp.eq.s32.totalorder %s19, 1
      %p42 = por %p40, %p41
      %p44 = scmp.ne.s32.totalorder %s27, %s43
      %p45 = scmp.eq.s32.totalorder %s19, 0
      %p46 = por %p44, %p45
      %s48 = sadd.s32 %s47, 1
      %p51 = scmp.eq.s32.totalorder %s13, 1
      %p52 = scmp.ne.s32.totalorder %s47, %s49
      %p53 = scmp.eq.s32.totalorder %s13, 0
      %p54 = por %p52, %p53
      %p55 = scmp.ne.s32.totalorder %s47, %s49
      %p56 = scmp.eq.s32.totalorder %s18, 1
      %p57 = por %p55, %p56
      %p58 = scmp.ne.s32.totalorder %s49, %s50
      %p59 = scmp.eq.s32.totalorder %s18, 0
      %p60 = por %p58, %p59
      %p61 = scmp.ne.s32.totalorder %s49, %s50
      %p62 = scmp.eq.s32.totalorder %s19, 1
      %p63 = por %p61, %p62
      %p65 = scmp.ne.s32.totalorder %s50, %s64
      %p66 = scmp.eq.s32.totalorder %s19, 0
      %p67 = por %p65, %p66
      %s69 = sadd.s32 %s68, 1
      %p72 = scmp.eq.s32.totalorder %s13, 1
      %p73 = scmp.ne.s32.totalorder %s68, %s70
      %p74 = scmp.eq.s32.totalorder %s13, 0
      %p75 = por %p73, %p74
      %p76 = scmp.ne.s32.totalorder %s68, %s70
      %p77 = scmp.eq.s32.totalorder %s18, 1
      %p78 = por %p76, %p77
      %p79 = scmp.ne.s32.totalorder %s70, %s71
      %p80 = scmp.eq.s32.totalorder %s18, 0
      %p81 = por %p79, %p80
      %p82 = scmp.ne.s32.totalorder %s70, %s71
      %p83 = scmp.eq.s32.totalorder %s19, 1
      %p84 = por %p82, %p83
      %p86 = scmp.ne.s32.totalorder %s71, %s85
      %p87 = scmp.eq.s32.totalorder %s19, 0
      %p88 = por %p86, %p87
      %s90 = sadd.s32 %s89, 1
      %p93 = scmp.eq.s32.totalorder %s13, 1
      %p94 = scmp.ne.s32.totalorder %s89, %s91
      %p95 = scmp.eq.s32.totalorder %s13, 0
      %p96 = por %p94, %p95
      %p97 = scmp.ne.s32.totalorder %s89, %s91
      %p98 = scmp.eq.s32.totalorder %s18, 1
      %p99 = por %p97, %p98
      %p100 = scmp.ne.s32.totalorder %s91, %s92
      %p101 = scmp.eq.s32.totalorder %s18, 0
      %p102 = por %p100, %p101
      %p103 = scmp.ne.s32.totalorder %s91, %s92
      %p104 = scmp.eq.s32.totalorder %s19, 1
      %p105 = por %p103, %p104
      %p107 = scmp.ne.s32.totalorder %s92, %s106
      %p108 = scmp.eq.s32.totalorder %s19, 0
      %p109 = por %p107, %p108
      %s110 = ssub.s32 %s13, %s20
      %p111 = scmp.eq.s32.totalorder %s110, 0
      %s113 = sadd.s32 %s112, 1
      %s114 = scalar_select %p111, %s112, %s113
      %p117 = pneg %p111
      %p118 = scmp.eq.s32.totalorder %s13, 1
      %p119 = por %p117, %p118
      %p120 = scmp.ne.s32.totalorder %s112, %s115
      %p121 = scmp.eq.s32.totalorder %s13, 0
      %p122 = por %p120, %p121
      %p123 = scmp.ne.s32.totalorder %s112, %s115
      %p124 = scmp.eq.s32.totalorder %s18, 1
      %p125 = por %p123, %p124
      %p126 = scmp.ne.s32.totalorder %s115, %s116
      %p127 = scmp.eq.s32.totalorder %s18, 0
      %p128 = por %p126, %p127
      %p129 = scmp.ne.s32.totalorder %s115, %s116
      %p130 = scmp.eq.s32.totalorder %s19, 1
      %p131 = por %p129, %p130
      %p133 = scmp.ne.s32.totalorder %s116, %s132
      %p134 = scmp.eq.s32.totalorder %s19, 0
      %p135 = por %p133, %p134
      %p136 = scmp.le.s32.totalorder 1, %s13
      %p137 = scmp.lt.s32.totalorder %s13, 3
      %p138 = pnand %p136, %p137
      %p139 = pneg %p138
      // Predicated region
      $region9: #{tpu_custom_call.1} parent=5 // pred_check
        _
      $region10: #{tpu_custom_call.1} parent=5 // pred_check_branch
        %141 = sbr.rel (%p138) target = $region12
      $region11: #{tpu_custom_call.1} parent=5 // pred_region
        %s142 = ssub.s32 %s13, 1
        // Predicated region
        $region13: #{tpu_custom_call.1} parent=11 // pred_check
          %p143 = pneg %p60
        $region14: #{tpu_custom_call.1} parent=11 // pred_check_branch
          %145 = sbr.rel (%p143) target = $region16
        $region15: #{tpu_custom_call.1} parent=11 // pred_region
          _
        $region16: #{tpu_custom_call.1} parent=11 // pred_fallthru
          _
        // Predicated region
        $region17: #{tpu_custom_call.1} parent=11 // pred_check
          %p146 = pneg %p81
        $region18: #{tpu_custom_call.1} parent=11 // pred_check_branch
          %148 = sbr.rel (%p146) target = $region20
        $region19: #{tpu_custom_call.1} parent=11 // pred_region
          _
        $region20: #{tpu_custom_call.1} parent=11 // pred_fallthru
          _
        // Predicated region
        $region21: #{tpu_custom_call.1} parent=11 // pred_check
          %p149 = pneg %p102
        $region22: #{tpu_custom_call.1} parent=11 // pred_check_branch
          %151 = sbr.rel (%p149) target = $region24
        $region23: #{tpu_custom_call.1} parent=11 // pred_region
          _
        $region24: #{tpu_custom_call.1} parent=11 // pred_fallthru
          _
      $region12: #{tpu_custom_call.1} parent=5 // pred_fallthru
        _
      %p152 = scmp.lt.s32.totalorder %s13, 2
      // Predicated region
      $region25: #{tpu_custom_call.1} parent=5 // pred_check
        %p153 = pneg %p152
      $region26: #{tpu_custom_call.1} parent=5 // pred_check_branch
        %155 = sbr.rel (%p153) target = $region28
      $region27: #{tpu_custom_call.1} parent=5 // pred_region
        // Predicated region
        $region29: #{tpu_custom_call.1} parent=27 // pred_check
          %p156 = pneg %p33
        $region30: #{tpu_custom_call.1} parent=27 // pred_check_branch
          %158 = sbr.rel (%p156) target = $region32
        $region31: #{tpu_custom_call.1} parent=27 // pred_region
          %p159 = scmp.lt.s32.totalorder %s13, 1
          %s160 = scalar_select %p159, %s13, 1
          %s161 = smul.addr %s160, 8
          %s162 = smul.addr %s161, 4
          %s163 = scalar_lea.vmem %s0, %s162
        $region32: #{tpu_custom_call.1} parent=27 // pred_fallthru
          _
      $region28: #{tpu_custom_call.1} parent=5 // pred_fallthru
        _
      %p164 = scmp.le.s32.totalorder 1, %s13
      %p165 = scmp.lt.s32.totalorder %s13, 3
      %p166 = pnand %p164, %p165
      %p167 = pneg %p166
      // Predicated region
      $region33: #{tpu_custom_call.1} parent=5 // pred_check
        _
      $region34: #{tpu_custom_call.1} parent=5 // pred_check_branch
        %169 = sbr.rel (%p166) target = $region36
      $region35: #{tpu_custom_call.1} parent=5 // pred_region
        %s170 = ssub.s32 %s13, 1
        %p171 = scmp.lt.s32.totalorder %s18, 1
        %s172 = scalar_select %p171, %s18, 1
        %s173 = smul.addr %s172, 8
        %s174 = smul.addr %s173, 4
        %s175 = scalar_lea.vmem %s0, %s174
        %p176 = pneg %p39
        %p177 = pneg %p36
        %p178 = pneg %p60
        %p179 = pneg %p57
        %p180 = pneg %p81
        %p181 = pneg %p78
        %p182 = pneg %p102
        %p183 = pneg %p99
        %p184 = pneg %p128
        %p185 = pneg %p125
        %s186 = sand.u32 %s115, 1
        %s187 = scalar_lea.sflag [#allocation3], %s186
        %s188 = sand.u32 %s115, 1
        %s189 = smul.addr %s188, 64
        %s190 = scalar_lea.vmem [#allocation2], %s189
        %p191 = scmp.lt.s32.totalorder %s18, 1
        %s192 = scalar_select %p191, %s18, 1
        %s193 = smul.addr %s192, 8
        %s194 = smul.addr %s193, 4
        %s195 = scalar_lea.vmem %s0, %s194
        %v197 = vld [vmem:[%s195] sm:$0xf]
        %v198 = vld [vmem:[%s195 + $0x4] sm:$0xf]
        %v199 = vld [vmem:[%s195 + $0x8] sm:$0xf]
        %v200 = vld [vmem:[%s195 + $0xc] sm:$0xf]
        %v201 = vld [vmem:[%s195 + $0x10] sm:$0xf]
        %v202 = vld [vmem:[%s195 + $0x14] sm:$0xf]
        %v203 = vld [vmem:[%s195 + $0x18] sm:$0xf]
        %v204 = vld [vmem:[%s195 + $0x1c] sm:$0xf]
        %v205 = vld [vmem:[%s1] sm:$0xf]
        %v206 = vld [vmem:[%s1 + $0x4] sm:$0xf]
        %v207 = vld [vmem:[%s1 + $0x8] sm:$0xf]
        %v208 = vld [vmem:[%s1 + $0xc] sm:$0xf]
        %v209 = vld [vmem:[%s1 + $0x10] sm:$0x3]
        %v218 = vunpack.c.l.b16 %v197
        %v219 = vunpack.c.l.b16 %v198
        %v220 = vunpack.c.l.b16 %v199
        %v221 = vunpack.c.l.b16 %v200
        %v222 = vunpack.c.l.b16 %v201
        %v223 = vunpack.c.l.b16 %v202
        %v224 = vunpack.c.l.b16 %v203
        %v225 = vunpack.c.l.b16 %v204
        %v226 = vpack.c.b16 %v219, %v218
        %v227 = vpack.c.b16 %v221, %v220
        %v228 = vpack.c.b16 %v223, %v222
        %v229 = vpack.c.b16 %v225, %v224
        %v235 = vunpack.c.l.b16 %v205
        %v236 = vunpack.c.l.b16 %v206
        %v237 = vunpack.c.l.b16 %v207
        %v238 = vunpack.c.l.b16 %v208
        %v239 = vunpack.c.l.b16 %v209
        %v240 = vpack.c.b16 %v236, %v235
        %v241 = vpack.c.b16 %v238, %v237
        %v242 = vpack.c.b16 %v239, %v239
        %vm245 = vcmask 293888
        %v247 = vsel %vm245, %v226, 0
        %v250 = vsel %vm245, %v227, 0
        %v253 = vsel %vm245, %v228, 0
        %v256 = vsel %vm245, %v229, 0
        %vm258 = vcmask 1041408
        %v260 = vsel %vm258, %v242, 0
        %262 = vmatprep.subr.bf16.mxu0 0
        %263 = vmatpush1.bf16.msra.mxu0 %v240
        %264 = vmatprep.subr.bf16.mxu0 0
        %265 = vmatpush1.bf16.msra.mxu0 %v241
        %266 = vmatprep.subr.bf16.mxu0 0
        %267 = vmatpush1.bf16.msra.mxu0 %v260
        %268 = vmatprep.subr.bf16.mxu0 0
        %269 = vmatpush1.bf16.msra.mxu0 0
        %270 = vmatprep.subr.bf16.mxu0 0
        %271 = vmatpush1.bf16.msra.mxu0 0
        %272 = vmatprep.subr.bf16.mxu0 0
        %273 = vmatpush1.bf16.msra.mxu0 0
        %274 = vmatprep.subr.bf16.mxu0 0
        %275 = vmatpush1.bf16.msra.mxu0 0
        %276 = vmatprep.subr.bf16.mxu0 0
        %277 = vmatpush1.bf16.msra.mxu0 0
        %278 = vmatprep.subr.bf16.mxu0 0
        %279 = vmatpush1.bf16.msra.mxu0 0
        %280 = vmatprep.subr.bf16.mxu0 0
        %281 = vmatpush1.bf16.msra.mxu0 0
        %282 = vmatprep.subr.bf16.mxu0 0
        %283 = vmatpush1.bf16.msra.mxu0 0
        %284 = vmatprep.subr.bf16.mxu0 0
        %285 = vmatpush1.bf16.msra.mxu0 0
        %286 = vmatprep.subr.bf16.mxu0 0
        %287 = vmatpush1.bf16.msra.mxu0 0
        %288 = vmatprep.subr.bf16.mxu0 0
        %289 = vmatpush1.bf16.msra.mxu0 0
        %290 = vmatprep.subr.bf16.mxu0 0
        %291 = vmatpush1.bf16.msra.mxu0 0
        %292 = vmatprep.subr.bf16.mxu0 0
        %293 = vmatpush1.bf16.msra.mxu0 0
        %294 = vmatprep.mubr.bf16.mxu0 0
        %295 = vmatmul.mubr.bf16.gmra.mrb[0].mxu0 %v247
        %v296 = vpop.f32.mrb[0].mxu0
        %v297 = vadd.f32 0.0, %v296
        %v298 = vpop.f32.mrb[0].mxu0
        %v299 = vpop.f32.mrb[0].mxu0
        %v300 = vadd.f32 0.0, %v299
        %v301 = vpop.f32.mrb[0].mxu0
        %302 = vmatprep.mubr.bf16.mxu0 0
        %303 = vmatmul.mubr.bf16.gmra.mrb[0].mxu0 %v250
        %v304 = vpop.f32.mrb[0].mxu0
        %v305 = vadd.f32 0.0, %v304
        %v306 = vpop.f32.mrb[0].mxu0
        %v307 = vpop.f32.mrb[0].mxu0
        %v308 = vadd.f32 0.0, %v307
        %v309 = vpop.f32.mrb[0].mxu0
        %310 = vmatprep.mubr.bf16.mxu0 0
        %311 = vmatmul.mubr.bf16.gmra.mrb[0].mxu0 %v253
        %v312 = vpop.f32.mrb[0].mxu0
        %v313 = vadd.f32 0.0, %v312
        %v314 = vpop.f32.mrb[0].mxu0
        %v315 = vpop.f32.mrb[0].mxu0
        %v316 = vadd.f32 0.0, %v315
        %v317 = vpop.f32.mrb[0].mxu0
        %318 = vmatprep.mubr.bf16.mxu0 0
        %319 = vmatmul.mubr.bf16.gmra.mrb[0].mxu0 %v256
        %v320 = vpop.f32.mrb[0].mxu0
        %v321 = vadd.f32 0.0, %v320
        %v322 = vpop.f32.mrb[0].mxu0
        %v323 = vpop.f32.mrb[0].mxu0
        %v324 = vadd.f32 0.0, %v323
        %v325 = vpop.f32.mrb[0].mxu0
        %326 = vdwg.mxu0
        %v327 = vld [vmem:[%s2] sm:$0x1]
        %v329 = vlaneseq
        %v330 = vshrl.u32 %v329, 7
        %v331 = vsub.s32 0, %v330
        %v332 = vrot.slane %v327, %v331
        %v334 = vmul.f32 %v297, %v332
        %v335 = vmul.f32 %v300, %v332
        %v336 = vmul.f32 %v305, %v332
        %v337 = vmul.f32 %v308, %v332
        %v338 = vmul.f32 %v313, %v332
        %v339 = vmul.f32 %v316, %v332
        %v340 = vmul.f32 %v321, %v332
        %v341 = vmul.f32 %v324, %v332
        %v342 = vld [vmem:[%s3] sm:$0x1]
        %v344 = vlaneseq
        %v345 = vshrl.u32 %v344, 7
        %v346 = vsub.s32 0, %v345
        %v347 = vrot.slane %v342, %v346
        %v349 = vadd.f32 %v334, %v347
        %v350 = vadd.f32 %v335, %v347
        %v351 = vadd.f32 %v336, %v347
        %v352 = vadd.f32 %v337, %v347
        %v353 = vadd.f32 %v338, %v347
        %v354 = vadd.f32 %v339, %v347
        %v355 = vadd.f32 %v340, %v347
        %v356 = vadd.f32 %v341, %v347
        %v357 = vmax.f32 %v349, -1.0
        %v358 = vmax.f32 %v350, -1.0
        %v359 = vmax.f32 %v351, -1.0
        %v360 = vmax.f32 %v352, -1.0
        %v361 = vmax.f32 %v353, -1.0
        %v362 = vmax.f32 %v354, -1.0
        %v363 = vmax.f32 %v355, -1.0
        %v364 = vmax.f32 %v356, -1.0
        %v365 = vmin.f32 %v357, 1.0
        %v366 = vmin.f32 %v358, 1.0
        %v367 = vmin.f32 %v359, 1.0
        %v368 = vmin.f32 %v360, 1.0
        %v369 = vmin.f32 %v361, 1.0
        %v370 = vmin.f32 %v362, 1.0
        %v371 = vmin.f32 %v363, 1.0
        %v372 = vmin.f32 %v364, 1.0
        %373 = vst [vmem:[%s190] sm:$0xff] %v365
        %374 = vst [vmem:[%s190 + $0x8] sm:$0xff] %v366
        %375 = vst [vmem:[%s190 + $0x10] sm:$0xff] %v367
        %376 = vst [vmem:[%s190 + $0x18] sm:$0xff] %v368
        %377 = vst [vmem:[%s190 + $0x20] sm:$0xff] %v369
        %378 = vst [vmem:[%s190 + $0x28] sm:$0xff] %v370
        %379 = vst [vmem:[%s190 + $0x30] sm:$0xff] %v371
        %380 = vst [vmem:[%s190 + $0x38] sm:$0xff] %v372
        %s381 = sand.u32 %s115, 1
        %s382 = scalar_lea.sflag [#allocation3], %s381
        %s383 = sand.u32 %s115, 1
        %s384 = smul.addr %s383, 64
        %s385 = scalar_lea.vmem [#allocation2], %s384
        // Predicated region
        $region37: #{tpu_custom_call.1} parent=35 // pred_check
          %p386 = pneg %p125
        $region38: #{tpu_custom_call.1} parent=35 // pred_check_branch
          %388 = sbr.rel (%p386) target = $region40
        $region39: #{tpu_custom_call.1} parent=35 // pred_region
          %s390 = ssub.s32 1024, 1024
          %391 = vsyncadd %s382, %s390
          %s392 = smul.addr %s18, 8
          %s393 = smul.addr %s392, 128
          %s394 = scalar_lea.hbm %s4, %s393
          %s395 = sshll.u32 %s385, 4
          %s396 = int_to_ptr.vmem [resolvable:$true] %s395
          %401 = dma.vmem_to_hbm [thread:$0]  %s396, 1024, %s394, %s382, 128, 128, 8
        $region40: #{tpu_custom_call.1} parent=35 // pred_fallthru
          _
      $region36: #{tpu_custom_call.1} parent=5 // pred_fallthru
        _
      %p402 = scmp.le.s32.totalorder 2, %s13
      // Predicated region
      $region41: #{tpu_custom_call.1} parent=5 // pred_check
        %p403 = pneg %p402
      $region42: #{tpu_custom_call.1} parent=5 // pred_check_branch
        %405 = sbr.rel (%p403) target = $region44
      $region43: #{tpu_custom_call.1} parent=5 // pred_region
        %s406 = ssub.s32 %s13, 2
        // Predicated region
        $region45: #{tpu_custom_call.1} parent=43 // pred_check
          %p407 = pneg %p131
        $region46: #{tpu_custom_call.1} parent=43 // pred_check_branch
          %409 = sbr.rel (%p407) target = $region48
        $region47: #{tpu_custom_call.1} parent=43 // pred_region
          %s410 = sand.u32 %s116, 1
          %s411 = scalar_lea.sflag [#allocation3], %s410
          %s412 = sand.u32 %s116, 1
          %s413 = smul.addr %s412, 64
          %s414 = scalar_lea.vmem [#allocation2], %s413
          %415 = dma.done %s411, 1024
        $region48: #{tpu_custom_call.1} parent=43 // pred_fallthru
          _
      $region44: #{tpu_custom_call.1} parent=5 // pred_fallthru
        _
    $region6: #{tpu_custom_call.1} parent=1 // loop_footer
      %s17 = sadd.s32 1, %s13
    $region7: #{tpu_custom_call.1} parent=1 // loop_footer_branch
      %12 = sbr.rel target = $region3
    $region8: #{tpu_custom_call.1} parent=1 // loop_exit
      _
    %416 = vsyncpa [#allocation3], 1
    %s417 = scalar_lea.sflag [#allocation3], 1
    %418 = vsyncpa %s417, 1

</llo_original>
